<compile_context>
chip_gen: v5e
topology: v5e:2x2
jax: 0.10.0
libtpu: 0.0.40
codegen_flags: <defaults>
</compile_context>

<pallas_src>
import functools
import math

import jax
import jax.numpy as jnp
from jax.experimental import pallas as pl
from jax.experimental.pallas import tpu as pltpu

# Module hyper-params (defaults of Actor.__init__)
MIN_LOG_STD = -20.0
MAX_LOG_STD = 2.0
MIN_ACTION = -1.0
MAX_ACTION = 1.0

LOG_2PI = math.log(2.0 * math.pi)


def _round_up(x, m):
    return ((x + m - 1) // m) * m


def _actor_kernel(state_ref, w1_ref, b1_ref, w2_ref, b2_ref, w3_ref, b3_ref,
                  w4_ref, b4_ref, log_std_ref, eps_ref,
                  action_ref, logp_ref):
    """One batch tile: 4-layer MLP + reparameterized sample + log_prob."""
    wdt = w1_ref.dtype                      # f32 or bf16 matmul operands
    x = state_ref[...]                      # (TB, S) — S unpadded

    # MLP: Linear -> ReLU -> Linear -> ReLU -> Linear -> ReLU -> Linear
    h = jnp.dot(x.astype(wdt), w1_ref[...],
                preferred_element_type=jnp.float32) + b1_ref[...]
    h = jnp.maximum(h, 0.0)
    h = jnp.dot(h.astype(wdt), w2_ref[...],
                preferred_element_type=jnp.float32) + b2_ref[...]
    h = jnp.maximum(h, 0.0)
    h = jnp.dot(h.astype(wdt), w3_ref[...],
                preferred_element_type=jnp.float32) + b3_ref[...]
    h = jnp.maximum(h, 0.0)
    # Layer 4 (mean) always fp32: keeps log_prob stable for very negative
    # log_std (0.5*exp(-2*log_std) amplifies any bf16 error in mean).
    mean = jnp.dot(h, w4_ref[...],
                   preferred_element_type=jnp.float32) + b4_ref[...]   # (TB, A)

    # policy = Normal(mean, exp(clamp(log_std)))
    log_std = jnp.clip(log_std_ref[...], MIN_LOG_STD, MAX_LOG_STD)     # (1, A)
    std = jnp.exp(log_std)                                             # (1, A)
    inv_two_var = 0.5 * jnp.exp(-2.0 * log_std)                        # (1, A)
    const_row = -log_std - 0.5 * LOG_2PI                               # (1, A)

    # action = policy.rsample(); action.clamp_(min_action, max_action)
    action = jnp.clip(mean + std * eps_ref[...], MIN_ACTION, MAX_ACTION)

    # Normal log_prob: -(a - mu)^2 / (2 sigma^2) - log sigma - 0.5 log(2 pi)
    # No padded lanes (A unpadded) -> no masking needed before the reduction.
    diff = action - mean
    elem_logp = const_row - (diff * diff) * inv_two_var                # (TB, A)
    logp = jnp.sum(elem_logp, axis=-1, keepdims=True)                  # (TB, 1)

    action_ref[...] = action.astype(action_ref.dtype)
    logp_ref[...] = logp.astype(logp_ref.dtype)


def prepare_params(params, *, use_bf16=True):
    """One-time padding/casting of Actor parameters for the kernel.

    Hidden dim is padded to a multiple of 128 (lane-dense MXU tiles); the
    state and action dims stay unpadded.  w1/w2/w3 are optionally cast to
    bf16; w4 (the mean head) stays fp32 for log_prob stability.
    """
    w1, b1, w2, b2, w3, b3, w4, b4, log_std = params
    S, H = w1.shape
    A = w4.shape[1]
    Hp = _round_up(H, 128)
    f32 = jnp.float32
    wdt = jnp.bfloat16 if use_bf16 else f32

    def pad_to(x, rows, cols, dtype):
        x = x.astype(dtype)
        pr, pc = rows - x.shape[0], cols - x.shape[1]
        if pr or pc:
            x = jnp.pad(x, ((0, pr), (0, pc)))
        return x

    return (
        pad_to(w1, S, Hp, wdt), pad_to(b1, 1, Hp, f32),
        pad_to(w2, Hp, Hp, wdt), pad_to(b2, 1, Hp, f32),
        pad_to(w3, Hp, Hp, wdt), pad_to(b3, 1, Hp, f32),
        pad_to(w4, Hp, A, f32), pad_to(b4, 1, A, f32),
        pad_to(log_std, 1, A, f32),
    )


def actor_forward(state, prepared_params, eps, *, batch_tile=512):
    """Runs the Actor forward pass with a batch-gridded Pallas kernel."""
    w1, b1, w2, b2, w3, b3, w4, b4, log_std = prepared_params
    B, S = state.shape
    Hp = w1.shape[1]
    A = w4.shape[1]
    f32 = jnp.float32

    # Batch tile: multiple of 8; large tiles preferred (per-step-overhead
    # bound once HBM padding is removed).
    TB = min(batch_tile, _round_up(B, 8))
    Bp = _round_up(B, TB)
    if Bp != B:
        state = jnp.pad(state, ((0, Bp - B), (0, 0)))
        eps = jnp.pad(eps, ((0, Bp - B), (0, 0)))

    grid = (Bp // TB,)

    def batch_spec(cols):
        # Last block dim equals the full (unpadded) array dim -> legal and
        # DMA volume matches the real data.
        return pl.BlockSpec((TB, cols), lambda i: (i, 0))

    def resident(shape):
        # Constant block index -> tile stays VMEM-resident across grid steps.
        # TODO(synk): for very large hidden_dim on v7x (64 MiB VMEM), add
        # pipeline_mode=pl.Buffered(1) here and/or keep use_bf16=True so the
        # resident weights fit the VMEM budget.
        return pl.BlockSpec(shape, lambda i: (0, 0))

    # VMEM budget (bytes): resident weights (pipeline may double-buffer them),
    # double-buffered batch tiles, fp32 hidden-activation temporaries.
    w_item = jnp.dtype(w1.dtype).itemsize
    w_bytes = (S * Hp + 2 * Hp * Hp) * w_item + Hp * A * 4 + (3 * Hp + 2 * A) * 4
    io_bytes = 2 * TB * (S + 2 * A + 1) * 4
    act_bytes = 6 * TB * Hp * 4
    vmem_need = 2 * w_bytes + io_bytes + act_bytes + (2 << 20)
    # Accurate request (no 32 MiB floor), capped below v7x's 64 MiB VMEM.
    vmem_limit = int(min(max(vmem_need, 16 << 20), 60 << 20))

    action, logp = pl.pallas_call(
        _actor_kernel,
        out_shape=(
            jax.ShapeDtypeStruct((Bp, A), f32),
            jax.ShapeDtypeStruct((Bp, 1), f32),
        ),
        grid=grid,
        in_specs=[
            batch_spec(S),                            # state
            resident((S, Hp)), resident((1, Hp)),     # layer 1
            resident((Hp, Hp)), resident((1, Hp)),    # layer 2
            resident((Hp, Hp)), resident((1, Hp)),    # layer 3
            resident((Hp, A)), resident((1, A)),      # layer 4 (fp32)
            resident((1, A)),                         # log_std
            batch_spec(A),                            # eps
        ],
        out_specs=(
            batch_spec(A),                            # action (B, A)
            batch_spec(1),                            # log_prob (B, 1)
        ),
        compiler_params=pltpu.CompilerParams(
            # TODO(synk): on v7x, verify the batch axis shards across both
            # TensorCores; if not, switch this axis to pltpu.CORE_PARALLEL.
            dimension_semantics=("parallel",),
            vmem_limit_bytes=vmem_limit,
        ),
    )(state, w1, b1, w2, b2, w3, b3, w4, b4, log_std, eps)

    if Bp != B:
        action = action[:B]
        logp = logp[:B]
    return action, logp


def init_params(key, state_dim, action_dim, hidden_dim):
    """Deterministic synthetic init of the Actor's parameters."""
    ks = jax.random.split(key, 8)

    def lin(kw, kb, fan_in, fan_out):
        bound = 1.0 / math.sqrt(fan_in)
        w = jax.random.uniform(kw, (fan_in, fan_out), jnp.float32, -bound, bound)
        b = jax.random.uniform(kb, (1, fan_out), jnp.float32, -bound, bound)
        return w, b

    w1, b1 = lin(ks[0], ks[1], state_dim, hidden_dim)
    w2, b2 = lin(ks[2], ks[3], hidden_dim, hidden_dim)
    w3, b3 = lin(ks[4], ks[5], hidden_dim, hidden_dim)
    w4, b4 = lin(ks[6], ks[7], hidden_dim, action_dim)
    log_std = jnp.zeros((1, action_dim), jnp.float32)   # nn.Parameter(zeros(A))
    return (w1, b1, w2, b2, w3, b3, w4, b4, log_std)


def _reference_forward(state, params, eps):
    """Pure-JAX reference for correctness check (mirrors torch forward)."""
    w1, b1, w2, b2, w3, b3, w4, b4, log_std = params
    h = jnp.maximum(state @ w1 + b1, 0.0)
    h = jnp.maximum(h @ w2 + b2, 0.0)
    h = jnp.maximum(h @ w3 + b3, 0.0)
    mean = h @ w4 + b4
    ls = jnp.clip(log_std, MIN_LOG_STD, MAX_LOG_STD)
    std = jnp.exp(ls)
    action = jnp.clip(mean + std * eps, MIN_ACTION, MAX_ACTION)
    logp = -((action - mean) ** 2) / (2.0 * std * std) - ls - 0.5 * LOG_2PI
    return action, jnp.sum(logp, axis=-1, keepdims=True)


if __name__ == "__main__":
    S, H, A = 16, 32, 8

    key = jax.random.PRNGKey(0)
    k_param, k_state, k_eps, k_state2, k_eps2 = jax.random.split(key, 5)
    params = init_params(k_param, S, A, H)

    # --- small batch, fp32 matmuls: tight tolerance -------------------------
    prep_f32 = prepare_params(params, use_bf16=False)   # one-time padding
    B = 8
    state = jax.random.normal(k_state, (B, S), jnp.float32)
    eps = jax.random.normal(k_eps, (B, A), jnp.float32)

    fwd_f32 = jax.jit(lambda s, p, e: actor_forward(s, p, e))
    action, log_prob = fwd_f32(state, prep_f32, eps)
    jax.block_until_ready((action, log_prob))

    ref_action, ref_logp = _reference_forward(state, params, eps)
    assert action.shape == (B, A) and log_prob.shape == (B, 1)
    assert jnp.allclose(action, ref_action, atol=1e-5, rtol=1e-5)
    assert jnp.allclose(log_prob, ref_logp, atol=1e-4, rtol=1e-5)

    # --- large batch (multi-step batch grid) + bf16 matmuls ------------------
    prep_bf16 = prepare_params(params, use_bf16=True)   # one-time pad + cast
    B2 = 512
    state2 = jax.random.normal(k_state2, (B2, S), jnp.float32)
    eps2 = jax.random.normal(k_eps2, (B2, A), jnp.float32)

    fwd_bf16 = jax.jit(lambda s, p, e: actor_forward(s, p, e, batch_tile=256))
    action2, log_prob2 = fwd_bf16(state2, prep_bf16, eps2)
    jax.block_until_ready((action2, log_prob2))

    ref_action2, ref_logp2 = _reference_forward(state2, params, eps2)
    assert action2.shape == (B2, A) and log_prob2.shape == (B2, 1)
    assert jnp.allclose(action2, ref_action2, atol=3e-2, rtol=3e-2)
    assert jnp.allclose(log_prob2, ref_logp2, atol=5e-1, rtol=5e-2)

    print("KERNEL_OK")
</pallas_src>

<mosaic_0001>
module attributes {stable_mosaic.version = 11 : i64} {
  func.func @_actor_kernel(%arg0: i32, %arg1: memref<8x16xf32, #tpu.memory_space<vmem>>, %arg2: memref<16x128xf32, #tpu.memory_space<vmem>>, %arg3: memref<1x128xf32, #tpu.memory_space<vmem>>, %arg4: memref<128x128xf32, #tpu.memory_space<vmem>>, %arg5: memref<1x128xf32, #tpu.memory_space<vmem>>, %arg6: memref<128x128xf32, #tpu.memory_space<vmem>>, %arg7: memref<1x128xf32, #tpu.memory_space<vmem>>, %arg8: memref<128x8xf32, #tpu.memory_space<vmem>>, %arg9: memref<1x8xf32, #tpu.memory_space<vmem>>, %arg10: memref<1x8xf32, #tpu.memory_space<vmem>>, %arg11: memref<8x8xf32, #tpu.memory_space<vmem>>, %arg12: memref<8x8xf32, #tpu.memory_space<vmem>>, %arg13: memref<8x1xf32, #tpu.memory_space<vmem>>) attributes {dimension_semantics = [#tpu.dimension_semantics<parallel>], iteration_bounds = array<i64: 1>, scalar_prefetch = 0 : i64, scratch_operands = 0 : i64, tpu.core_type = #tpu.core_type<tc>, window_params = [{transform_indices = @transform_0, window_bounds = array<i64: 8, 16>}, {pipeline_mode = #tpu.pipeline_mode<synchronous>, transform_indices = @transform_1, window_bounds = array<i64: 16, 128>}, {pipeline_mode = #tpu.pipeline_mode<synchronous>, transform_indices = @transform_2, window_bounds = array<i64: 1, 128>}, {pipeline_mode = #tpu.pipeline_mode<synchronous>, transform_indices = @transform_3, window_bounds = array<i64: 128, 128>}, {pipeline_mode = #tpu.pipeline_mode<synchronous>, transform_indices = @transform_4, window_bounds = array<i64: 1, 128>}, {pipeline_mode = #tpu.pipeline_mode<synchronous>, transform_indices = @transform_5, window_bounds = array<i64: 128, 128>}, {pipeline_mode = #tpu.pipeline_mode<synchronous>, transform_indices = @transform_6, window_bounds = array<i64: 1, 128>}, {pipeline_mode = #tpu.pipeline_mode<synchronous>, transform_indices = @transform_7, window_bounds = array<i64: 128, 8>}, {pipeline_mode = #tpu.pipeline_mode<synchronous>, transform_indices = @transform_8, window_bounds = array<i64: 1, 8>}, {pipeline_mode = #tpu.pipeline_mode<synchronous>, transform_indices = @transform_9, window_bounds = array<i64: 1, 8>}, {transform_indices = @transform_10, window_bounds = array<i64: 8, 8>}, {transform_indices = @transform_11, window_bounds = array<i64: 8, 8>}, {transform_indices = @transform_12, window_bounds = array<i64: 8, 1>}]} {
    %c0 = arith.constant 0 : index
    %c0_0 = arith.constant 0 : index
    %0 = vector.load %arg1[%c0, %c0_0] : memref<8x16xf32, #tpu.memory_space<vmem>>, vector<8x16xf32>
    %c0_1 = arith.constant 0 : index
    %c0_2 = arith.constant 0 : index
    %1 = vector.load %arg2[%c0_1, %c0_2] : memref<16x128xf32, #tpu.memory_space<vmem>>, vector<16x128xf32>
    %cst = arith.constant dense<0.000000e+00> : vector<8x128xf32>
    %2 = tpu.matmul %0, %1, %cst {dimension_numbers = #tpu.dot_dimension_numbers<[1], [0], [0], [1], [0, 0, 1, 1], [], []>} : vector<8x16xf32>, vector<16x128xf32>, vector<8x128xf32> -> vector<8x128xf32>
    %c0_3 = arith.constant 0 : index
    %c0_4 = arith.constant 0 : index
    %3 = vector.load %arg3[%c0_3, %c0_4] : memref<1x128xf32, #tpu.memory_space<vmem>>, vector<1x128xf32>
    %4 = vector.broadcast %3 : vector<1x128xf32> to vector<8x128xf32>
    %5 = arith.addf %2, %4 : vector<8x128xf32>
    %cst_5 = arith.constant 0.000000e+00 : f32
    %6 = vector.broadcast %cst_5 : f32 to vector<8x128xf32>
    %7 = arith.maximumf %5, %6 : vector<8x128xf32>
    %c0_6 = arith.constant 0 : index
    %c0_7 = arith.constant 0 : index
    %8 = vector.load %arg4[%c0_6, %c0_7] : memref<128x128xf32, #tpu.memory_space<vmem>>, vector<128x128xf32>
    %cst_8 = arith.constant dense<0.000000e+00> : vector<8x128xf32>
    %9 = tpu.matmul %7, %8, %cst_8 {dimension_numbers = #tpu.dot_dimension_numbers<[1], [0], [0], [1], [0, 0, 1, 1], [], []>} : vector<8x128xf32>, vector<128x128xf32>, vector<8x128xf32> -> vector<8x128xf32>
    %c0_9 = arith.constant 0 : index
    %c0_10 = arith.constant 0 : index
    %10 = vector.load %arg5[%c0_9, %c0_10] : memref<1x128xf32, #tpu.memory_space<vmem>>, vector<1x128xf32>
    %11 = vector.broadcast %10 : vector<1x128xf32> to vector<8x128xf32>
    %12 = arith.addf %9, %11 : vector<8x128xf32>
    %cst_11 = arith.constant 0.000000e+00 : f32
    %13 = vector.broadcast %cst_11 : f32 to vector<8x128xf32>
    %14 = arith.maximumf %12, %13 : vector<8x128xf32>
    %c0_12 = arith.constant 0 : index
    %c0_13 = arith.constant 0 : index
    %15 = vector.load %arg6[%c0_12, %c0_13] : memref<128x128xf32, #tpu.memory_space<vmem>>, vector<128x128xf32>
    %cst_14 = arith.constant dense<0.000000e+00> : vector<8x128xf32>
    %16 = tpu.matmul %14, %15, %cst_14 {dimension_numbers = #tpu.dot_dimension_numbers<[1], [0], [0], [1], [0, 0, 1, 1], [], []>} : vector<8x128xf32>, vector<128x128xf32>, vector<8x128xf32> -> vector<8x128xf32>
    %c0_15 = arith.constant 0 : index
    %c0_16 = arith.constant 0 : index
    %17 = vector.load %arg7[%c0_15, %c0_16] : memref<1x128xf32, #tpu.memory_space<vmem>>, vector<1x128xf32>
    %18 = vector.broadcast %17 : vector<1x128xf32> to vector<8x128xf32>
    %19 = arith.addf %16, %18 : vector<8x128xf32>
    %cst_17 = arith.constant 0.000000e+00 : f32
    %20 = vector.broadcast %cst_17 : f32 to vector<8x128xf32>
    %21 = arith.maximumf %19, %20 : vector<8x128xf32>
    %c0_18 = arith.constant 0 : index
    %c0_19 = arith.constant 0 : index
    %22 = vector.load %arg8[%c0_18, %c0_19] : memref<128x8xf32, #tpu.memory_space<vmem>>, vector<128x8xf32>
    %cst_20 = arith.constant dense<0.000000e+00> : vector<8x8xf32>
    %23 = tpu.matmul %21, %22, %cst_20 {dimension_numbers = #tpu.dot_dimension_numbers<[1], [0], [0], [1], [0, 0, 1, 1], [], []>} : vector<8x128xf32>, vector<128x8xf32>, vector<8x8xf32> -> vector<8x8xf32>
    %c0_21 = arith.constant 0 : index
    %c0_22 = arith.constant 0 : index
    %24 = vector.load %arg9[%c0_21, %c0_22] : memref<1x8xf32, #tpu.memory_space<vmem>>, vector<1x8xf32>
    %25 = vector.broadcast %24 : vector<1x8xf32> to vector<8x8xf32>
    %26 = arith.addf %23, %25 : vector<8x8xf32>
    %c0_23 = arith.constant 0 : index
    %c0_24 = arith.constant 0 : index
    %27 = vector.load %arg10[%c0_23, %c0_24] : memref<1x8xf32, #tpu.memory_space<vmem>>, vector<1x8xf32>
    %cst_25 = arith.constant -2.000000e+01 : f32
    %cst_26 = arith.constant 2.000000e+00 : f32
    %28 = vector.broadcast %cst_25 : f32 to vector<1x8xf32>
    %29 = arith.maximumf %28, %27 : vector<1x8xf32>
    %30 = vector.broadcast %cst_26 : f32 to vector<1x8xf32>
    %31 = arith.minimumf %30, %29 : vector<1x8xf32>
    %32 = math.exp %31 : vector<1x8xf32>
    %cst_27 = arith.constant -2.000000e+00 : f32
    %33 = vector.broadcast %cst_27 : f32 to vector<1x8xf32>
    %34 = arith.mulf %33, %31 : vector<1x8xf32>
    %35 = math.exp %34 : vector<1x8xf32>
    %cst_28 = arith.constant 5.000000e-01 : f32
    %36 = vector.broadcast %cst_28 : f32 to vector<1x8xf32>
    %37 = arith.mulf %36, %35 : vector<1x8xf32>
    %cst_29 = arith.constant 0.000000e+00 : f32
    %38 = vector.broadcast %cst_29 : f32 to vector<1x8xf32>
    %39 = arith.subf %38, %31 : vector<1x8xf32>
    %cst_30 = arith.constant 0.918938517 : f32
    %40 = vector.broadcast %cst_30 : f32 to vector<1x8xf32>
    %41 = arith.subf %39, %40 : vector<1x8xf32>
    %c0_31 = arith.constant 0 : index
    %c0_32 = arith.constant 0 : index
    %42 = vector.load %arg11[%c0_31, %c0_32] : memref<8x8xf32, #tpu.memory_space<vmem>>, vector<8x8xf32>
    %43 = vector.broadcast %32 : vector<1x8xf32> to vector<8x8xf32>
    %44 = arith.mulf %43, %42 : vector<8x8xf32>
    %45 = arith.addf %26, %44 : vector<8x8xf32>
    %cst_33 = arith.constant -1.000000e+00 : f32
    %cst_34 = arith.constant 1.000000e+00 : f32
    %46 = vector.broadcast %cst_33 : f32 to vector<8x8xf32>
    %47 = arith.maximumf %46, %45 : vector<8x8xf32>
    %48 = vector.broadcast %cst_34 : f32 to vector<8x8xf32>
    %49 = arith.minimumf %48, %47 : vector<8x8xf32>
    %50 = arith.subf %49, %26 : vector<8x8xf32>
    %51 = arith.mulf %50, %50 : vector<8x8xf32>
    %52 = vector.broadcast %37 : vector<1x8xf32> to vector<8x8xf32>
    %53 = arith.mulf %51, %52 : vector<8x8xf32>
    %54 = vector.broadcast %41 : vector<1x8xf32> to vector<8x8xf32>
    %55 = arith.subf %54, %53 : vector<8x8xf32>
    %cst_35 = arith.constant dense<0.000000e+00> : vector<8xf32>
    %56 = vector.multi_reduction <add>, %55, %cst_35 [1] : vector<8x8xf32> to vector<8xf32>
    %57 = vector.shape_cast %56 : vector<8xf32> to vector<8x1xf32>
    %c0_36 = arith.constant 0 : index
    %c0_37 = arith.constant 0 : index
    %58 = vector.load %arg12[%c0_36, %c0_37] : memref<8x8xf32, #tpu.memory_space<vmem>>, vector<8x8xf32>
    tpu.vector_store %arg12[%c0_36, %c0_37], %49 {strides = array<i32>} : memref<8x8xf32, #tpu.memory_space<vmem>>, vector<8x8xf32>,
    %c0_38 = arith.constant 0 : index
    %c0_39 = arith.constant 0 : index
    %59 = vector.load %arg13[%c0_38, %c0_39] : memref<8x1xf32, #tpu.memory_space<vmem>>, vector<8x1xf32>
    tpu.vector_store %arg13[%c0_38, %c0_39], %57 {strides = array<i32>} : memref<8x1xf32, #tpu.memory_space<vmem>>, vector<8x1xf32>,
    return
  }
  func.func @transform_0(%arg0: i32) -> (i32, i32) {
    %c0_i32 = arith.constant 0 : i32
    %c0_i32_0 = arith.constant 0 : i32
    return %arg0, %c0_i32 : i32, i32
  }
  func.func @transform_1(%arg0: i32) -> (i32, i32) {
    %c0_i32 = arith.constant 0 : i32
    %c0_i32_0 = arith.constant 0 : i32
    %c0_i32_1 = arith.constant 0 : i32
    return %c0_i32, %c0_i32_0 : i32, i32
  }
  func.func @transform_2(%arg0: i32) -> (i32, i32) {
    %c0_i32 = arith.constant 0 : i32
    %c0_i32_0 = arith.constant 0 : i32
    %c0_i32_1 = arith.constant 0 : i32
    return %c0_i32, %c0_i32_0 : i32, i32
  }
  func.func @transform_3(%arg0: i32) -> (i32, i32) {
    %c0_i32 = arith.constant 0 : i32
    %c0_i32_0 = arith.constant 0 : i32
    %c0_i32_1 = arith.constant 0 : i32
    return %c0_i32, %c0_i32_0 : i32, i32
  }
  func.func @transform_4(%arg0: i32) -> (i32, i32) {
    %c0_i32 = arith.constant 0 : i32
    %c0_i32_0 = arith.constant 0 : i32
    %c0_i32_1 = arith.constant 0 : i32
    return %c0_i32, %c0_i32_0 : i32, i32
  }
  func.func @transform_5(%arg0: i32) -> (i32, i32) {
    %c0_i32 = arith.constant 0 : i32
    %c0_i32_0 = arith.constant 0 : i32
    %c0_i32_1 = arith.constant 0 : i32
    return %c0_i32, %c0_i32_0 : i32, i32
  }
  func.func @transform_6(%arg0: i32) -> (i32, i32) {
    %c0_i32 = arith.constant 0 : i32
    %c0_i32_0 = arith.constant 0 : i32
    %c0_i32_1 = arith.constant 0 : i32
    return %c0_i32, %c0_i32_0 : i32, i32
  }
  func.func @transform_7(%arg0: i32) -> (i32, i32) {
    %c0_i32 = arith.constant 0 : i32
    %c0_i32_0 = arith.constant 0 : i32
    %c0_i32_1 = arith.constant 0 : i32
    return %c0_i32, %c0_i32_0 : i32, i32
  }
  func.func @transform_8(%arg0: i32) -> (i32, i32) {
    %c0_i32 = arith.constant 0 : i32
    %c0_i32_0 = arith.constant 0 : i32
    %c0_i32_1 = arith.constant 0 : i32
    return %c0_i32, %c0_i32_0 : i32, i32
  }
  func.func @transform_9(%arg0: i32) -> (i32, i32) {
    %c0_i32 = arith.constant 0 : i32
    %c0_i32_0 = arith.constant 0 : i32
    %c0_i32_1 = arith.constant 0 : i32
    return %c0_i32, %c0_i32_0 : i32, i32
  }
  func.func @transform_10(%arg0: i32) -> (i32, i32) {
    %c0_i32 = arith.constant 0 : i32
    %c0_i32_0 = arith.constant 0 : i32
    return %arg0, %c0_i32 : i32, i32
  }
  func.func @transform_11(%arg0: i32) -> (i32, i32) {
    %c0_i32 = arith.constant 0 : i32
    %c0_i32_0 = arith.constant 0 : i32
    return %arg0, %c0_i32 : i32, i32
  }
  func.func @transform_12(%arg0: i32) -> (i32, i32) {
    %c0_i32 = arith.constant 0 : i32
    %c0_i32_0 = arith.constant 0 : i32
    return %arg0, %c0_i32 : i32, i32
  }
}

</mosaic_0001>

<llo_original>
// kernel: _lambda_.1
$region0: #{_lambda_.1}
  #allocation0 [shape = 'u32[]', space=smem, size = 0x4, offset = 0x4, fixed_abs, tag = 'smem constant byte address 0x4 - core index']
  #allocation1 [shape = 'u32[72,128]{1,0:T(1,128)}', space=vmem, size = 0x9000, scoped, tag = 'internal scratch']
  %s0 = inlined_call_operand.vmem [shape: f32[8,16], index: 0, kind: input, shape index: {}]
  %s1 = inlined_call_operand.hbm [shape: f32[16,128], index: 1, kind: input, shape index: {}]
  %s2 = inlined_call_operand.vmem [shape: f32[1,128], index: 2, kind: input, shape index: {}]
  %s3 = inlined_call_operand.vmem [shape: f32[128,128], index: 3, kind: input, shape index: {}]
  %s4 = inlined_call_operand.hbm [shape: f32[1,128], index: 4, kind: input, shape index: {}]
  %s5 = inlined_call_operand.hbm [shape: f32[128,128], index: 5, kind: input, shape index: {}]
  %s6 = inlined_call_operand.hbm [shape: f32[1,128], index: 6, kind: input, shape index: {}]
  %s7 = inlined_call_operand.vmem [shape: f32[128,8], index: 7, kind: input, shape index: {}]
  %s8 = inlined_call_operand.hbm [shape: f32[1,8], index: 8, kind: input, shape index: {}]
  %s9 = inlined_call_operand.hbm [shape: f32[1,8], index: 9, kind: input, shape index: {}]
  %s10 = inlined_call_operand.vmem [shape: f32[8,8], index: 10, kind: input, shape index: {}]
  %s11 = inlined_call_operand.hbm [shape: f32[8,8], index: 11, kind: output, shape index: {0}]
  %s12 = inlined_call_operand.vmem [shape: f32[8,1], index: 12, kind: output, shape index: {1}]
  %13 = xla_tuple %s11, %s12
  %s14 = sld [smem:[#allocation0]]
  $region86: #{_lambda_.1} parent=0
    _
  %s16 = ssub.s32 1, %s14
  %s17 = scalar_select 0, %s16, %s14
  $region1: #{_lambda_.1} parent=0
    #allocation2 [shape = 'u8[8192]{0}', space=vmem, size = 0x2000, scoped, tag = 'input window, operand 1, single buffered']
    #allocation3 [shape = 's32[1]{0}', space=sflag, size = 0x4, scoped, tag = 'scoped memory for _lambda_.1']
    #allocation4 [shape = 's32[1]{0}', space=sflag, size = 0x4, scoped, tag = 'scoped memory for _lambda_.1']
    #allocation5 [shape = 'u8[512]{0}', space=vmem, size = 0x400, scoped, tag = 'input window, operand 4, single buffered']
    #allocation6 [shape = 's32[1]{0}', space=sflag, size = 0x4, scoped, tag = 'scoped memory for _lambda_.1']
    #allocation7 [shape = 'u8[65536]{0}', space=vmem, size = 0x10000, scoped, tag = 'input window, operand 5, single buffered']
    #allocation8 [shape = 'u8[512]{0}', space=vmem, size = 0x400, scoped, tag = 'input window, operand 6, single buffered']
    #allocation9 [shape = 's32[1]{0}', space=sflag, size = 0x4, scoped, tag = 'scoped memory for _lambda_.1']
    #allocation10 [shape = 'u8[512]{0}', space=vmem, size = 0x400, scoped, tag = 'input window, operand 8, single buffered']
    #allocation11 [shape = 'u8[512]{0}', space=vmem, size = 0x400, scoped, tag = 'input window, operand 9, single buffered']
    #allocation12 [shape = 's32[1]{0}', space=sflag, size = 0x4, scoped, tag = 'scoped memory for _lambda_.1']
    #allocation13 [shape = 'u8[4096]{0}', space=vmem, size = 0x1000, scoped, tag = 'output window, operand 0, single buffered']
    %18 = vsyncpa [#allocation3], 0
    %19 = vsyncpa [#allocation6], 0
    %20 = vsyncpa [#allocation9], 0
    %21 = vsyncpa [#allocation12], 0
    %22 = vsyncpa [#allocation4], 0
    // Predicated region
    $region2: #{_lambda_.1} parent=1 // pred_check
      _
    $region3: #{_lambda_.1} parent=1 // pred_check_branch
      %24 = sbr.rel (0) target = $region5
    $region4: #{_lambda_.1} parent=1 // pred_region
      _
    $region5: #{_lambda_.1} parent=1 // pred_fallthru
      _
    // Predicated region
    $region6: #{_lambda_.1} parent=1 // pred_check
      _
    $region7: #{_lambda_.1} parent=1 // pred_check_branch
      %26 = sbr.rel (0) target = $region9
    $region8: #{_lambda_.1} parent=1 // pred_region
      %28 = vsyncadd [#allocation3], 0
      %s29 = sshll.u32 %s1, 4
      %s30 = int_to_ptr.hbm [resolvable:$true] %s29
      %s31 = sshll.u32 [#allocation2], 4
      %s32 = int_to_ptr.vmem [resolvable:$true] %s31
      %37 = dma.hbm_to_vmem [thread:$0]  %s30, 256, %s32, [#allocation3], 128, 128, 8
    $region9: #{_lambda_.1} parent=1 // pred_fallthru
      _
    // Predicated region
    $region10: #{_lambda_.1} parent=1 // pred_check
      _
    $region11: #{_lambda_.1} parent=1 // pred_check_branch
      %39 = sbr.rel (0) target = $region13
    $region12: #{_lambda_.1} parent=1 // pred_region
      _
    $region13: #{_lambda_.1} parent=1 // pred_fallthru
      _
    // Predicated region
    $region14: #{_lambda_.1} parent=1 // pred_check
      _
    $region15: #{_lambda_.1} parent=1 // pred_check_branch
      %41 = sbr.rel (0) target = $region17
    $region16: #{_lambda_.1} parent=1 // pred_region
      _
    $region17: #{_lambda_.1} parent=1 // pred_fallthru
      _
    // Predicated region
    $region18: #{_lambda_.1} parent=1 // pred_check
      _
    $region19: #{_lambda_.1} parent=1 // pred_check_branch
      %43 = sbr.rel (0) target = $region21
    $region20: #{_lambda_.1} parent=1 // pred_region
      %45 = vsyncadd [#allocation6], 0
      %s47 = sshll.u32 %s4, 4
      %s48 = int_to_ptr.hbm [resolvable:$true] %s47
      %s49 = sshll.u32 [#allocation5], 4
      %s50 = int_to_ptr.vmem [resolvable:$true] %s49
      %52 = dma.hbm_to_vmem [thread:$0]  %s48, 16, %s50, [#allocation6]
    $region21: #{_lambda_.1} parent=1 // pred_fallthru
      _
    // Predicated region
    $region22: #{_lambda_.1} parent=1 // pred_check
      _
    $region23: #{_lambda_.1} parent=1 // pred_check_branch
      %54 = sbr.rel (0) target = $region25
    $region24: #{_lambda_.1} parent=1 // pred_region
      %56 = vsyncadd [#allocation6], 0
      %s57 = sshll.u32 %s5, 4
      %s58 = int_to_ptr.hbm [resolvable:$true] %s57
      %s59 = sshll.u32 [#allocation7], 4
      %s60 = int_to_ptr.vmem [resolvable:$true] %s59
      %65 = dma.hbm_to_vmem [thread:$0]  %s58, 2048, %s60, [#allocation6], 128, 128, 8
    $region25: #{_lambda_.1} parent=1 // pred_fallthru
      _
    // Predicated region
    $region26: #{_lambda_.1} parent=1 // pred_check
      _
    $region27: #{_lambda_.1} parent=1 // pred_check_branch
      %67 = sbr.rel (0) target = $region29
    $region28: #{_lambda_.1} parent=1 // pred_region
      %69 = vsyncadd [#allocation9], 0
      %s71 = sshll.u32 %s6, 4
      %s72 = int_to_ptr.hbm [resolvable:$true] %s71
      %s73 = sshll.u32 [#allocation8], 4
      %s74 = int_to_ptr.vmem [resolvable:$true] %s73
      %76 = dma.hbm_to_vmem [thread:$0]  %s72, 16, %s74, [#allocation9]
    $region29: #{_lambda_.1} parent=1 // pred_fallthru
      _
    // Predicated region
    $region30: #{_lambda_.1} parent=1 // pred_check
      _
    $region31: #{_lambda_.1} parent=1 // pred_check_branch
      %78 = sbr.rel (0) target = $region33
    $region32: #{_lambda_.1} parent=1 // pred_region
      _
    $region33: #{_lambda_.1} parent=1 // pred_fallthru
      _
    // Predicated region
    $region34: #{_lambda_.1} parent=1 // pred_check
      _
    $region35: #{_lambda_.1} parent=1 // pred_check_branch
      %80 = sbr.rel (0) target = $region37
    $region36: #{_lambda_.1} parent=1 // pred_region
      %82 = vsyncadd [#allocation9], 0
      %s84 = sshll.u32 %s8, 4
      %s85 = int_to_ptr.hbm [resolvable:$true] %s84
      %s86 = sshll.u32 [#allocation10], 4
      %s87 = int_to_ptr.vmem [resolvable:$true] %s86
      %89 = dma.hbm_to_vmem [thread:$0]  %s85, 16, %s87, [#allocation9]
    $region37: #{_lambda_.1} parent=1 // pred_fallthru
      _
    // Predicated region
    $region38: #{_lambda_.1} parent=1 // pred_check
      _
    $region39: #{_lambda_.1} parent=1 // pred_check_branch
      %91 = sbr.rel (0) target = $region41
    $region40: #{_lambda_.1} parent=1 // pred_region
      %93 = vsyncadd [#allocation12], 0
      %s95 = sshll.u32 %s9, 4
      %s96 = int_to_ptr.hbm [resolvable:$true] %s95
      %s97 = sshll.u32 [#allocation11], 4
      %s98 = int_to_ptr.vmem [resolvable:$true] %s97
      %100 = dma.hbm_to_vmem [thread:$0]  %s96, 16, %s98, [#allocation12]
    $region41: #{_lambda_.1} parent=1 // pred_fallthru
      _
    // Predicated region
    $region42: #{_lambda_.1} parent=1 // pred_check
      _
    $region43: #{_lambda_.1} parent=1 // pred_check_branch
      %102 = sbr.rel (0) target = $region45
    $region44: #{_lambda_.1} parent=1 // pred_region
      _
    $region45: #{_lambda_.1} parent=1 // pred_fallthru
      _
    // Predicated region
    $region46: #{_lambda_.1} parent=1 // pred_check
      _
    $region47: #{_lambda_.1} parent=1 // pred_check_branch
      %104 = sbr.rel (0) target = $region49
    $region48: #{_lambda_.1} parent=1 // pred_region
      %106 = dma.done [#allocation3], 256
    $region49: #{_lambda_.1} parent=1 // pred_fallthru
      _
    // Predicated region
    $region50: #{_lambda_.1} parent=1 // pred_check
      _
    $region51: #{_lambda_.1} parent=1 // pred_check_branch
      %108 = sbr.rel (0) target = $region53
    $region52: #{_lambda_.1} parent=1 // pred_region
      %110 = dma.done [#allocation6], 16
    $region53: #{_lambda_.1} parent=1 // pred_fallthru
      _
    // Predicated region
    $region54: #{_lambda_.1} parent=1 // pred_check
      _
    $region55: #{_lambda_.1} parent=1 // pred_check_branch
      %112 = sbr.rel (0) target = $region57
    $region56: #{_lambda_.1} parent=1 // pred_region
      %114 = dma.done [#allocation6], 2048
    $region57: #{_lambda_.1} parent=1 // pred_fallthru
      _
    // Predicated region
    $region58: #{_lambda_.1} parent=1 // pred_check
      _
    $region59: #{_lambda_.1} parent=1 // pred_check_branch
      %116 = sbr.rel (0) target = $region61
    $region60: #{_lambda_.1} parent=1 // pred_region
      %118 = dma.done [#allocation9], 16
    $region61: #{_lambda_.1} parent=1 // pred_fallthru
      _
    // Predicated region
    $region62: #{_lambda_.1} parent=1 // pred_check
      _
    $region63: #{_lambda_.1} parent=1 // pred_check_branch
      %120 = sbr.rel (0) target = $region65
    $region64: #{_lambda_.1} parent=1 // pred_region
      %122 = dma.done [#allocation9], 16
    $region65: #{_lambda_.1} parent=1 // pred_fallthru
      _
    // Predicated region
    $region66: #{_lambda_.1} parent=1 // pred_check
      _
    $region67: #{_lambda_.1} parent=1 // pred_check_branch
      %124 = sbr.rel (0) target = $region69
    $region68: #{_lambda_.1} parent=1 // pred_region
      %126 = dma.done [#allocation12], 16
    $region69: #{_lambda_.1} parent=1 // pred_fallthru
      _
    %v127 = vld [vmem:[%s0] sm:$0xff]
    %v128 = vld [vmem:[#allocation2] sm:$0xff]
    %v129 = vld [vmem:[#allocation2 + $0x8] sm:$0xff]
    %v130 = vld [vmem:[%s2] sm:$0x1]
    %v132 = vperm.slane %v130, 0
    %vm134 = vcmask 130048
    %v136 = vsel %vm134, %v127, 0
    %138 = vmatpush.msra.mxu0 0.0
    %139 = vmatpush.msra.mxu0 0.0
    %140 = vmatpush.msra.mxu0 0.0
    %141 = vmatpush.msra.mxu0 0.0
    %142 = vmatpush.msra.mxu0 0.0
    %143 = vmatpush.msra.mxu0 0.0
    %144 = vmatpush.msra.mxu0 0.0
    %145 = vmatpush.msra.mxu0 0.0
    %146 = vmatpush.msra.mxu0 0.0
    %147 = vmatpush.msra.mxu0 0.0
    %148 = vmatpush.msra.mxu0 0.0
    %149 = vmatpush.msra.mxu0 0.0
    %150 = vmatpush.msra.mxu0 0.0
    %151 = vmatpush.msra.mxu0 0.0
    %152 = vmatpush.msra.mxu0 %v129
    %153 = vmatpush.msra.mxu0 %v128
    %154 = vmatmul.f32.gmra.mxu0 %v136
    %v155 = vpop.f32.mrf.mxu0
    %v156 = vadd.f32 %v132, %v155
    %157 = vdwg.mxu0
    %v158 = vmax.f32 %v156, 0.0
    %v159 = vld [vmem:[%s3] sm:$0xff]
    %v160 = vld [vmem:[%s3 + $0x8] sm:$0xff]
    %v161 = vld [vmem:[%s3 + $0x10] sm:$0xff]
    %v162 = vld [vmem:[%s3 + $0x18] sm:$0xff]
    %v163 = vld [vmem:[%s3 + $0x20] sm:$0xff]
    %v164 = vld [vmem:[%s3 + $0x28] sm:$0xff]
    %v165 = vld [vmem:[%s3 + $0x30] sm:$0xff]
    %v166 = vld [vmem:[%s3 + $0x38] sm:$0xff]
    %v167 = vld [vmem:[%s3 + $0x40] sm:$0xff]
    %v168 = vld [vmem:[%s3 + $0x48] sm:$0xff]
    %v169 = vld [vmem:[%s3 + $0x50] sm:$0xff]
    %v170 = vld [vmem:[%s3 + $0x58] sm:$0xff]
    %v171 = vld [vmem:[%s3 + $0x60] sm:$0xff]
    %v172 = vld [vmem:[%s3 + $0x68] sm:$0xff]
    %v173 = vld [vmem:[%s3 + $0x70] sm:$0xff]
    %v174 = vld [vmem:[%s3 + $0x78] sm:$0xff]
    %v175 = vld [vmem:[#allocation5] sm:$0x1]
    %v177 = vperm.slane %v175, 0
    %179 = vmatpush.msra.mxu0 %v174
    %180 = vmatpush.msra.mxu0 %v173
    %181 = vmatpush.msra.mxu0 %v172
    %182 = vmatpush.msra.mxu0 %v171
    %183 = vmatpush.msra.mxu0 %v170
    %184 = vmatpush.msra.mxu0 %v169
    %185 = vmatpush.msra.mxu0 %v168
    %186 = vmatpush.msra.mxu0 %v167
    %187 = vmatpush.msra.mxu0 %v166
    %188 = vmatpush.msra.mxu0 %v165
    %189 = vmatpush.msra.mxu0 %v164
    %190 = vmatpush.msra.mxu0 %v163
    %191 = vmatpush.msra.mxu0 %v162
    %192 = vmatpush.msra.mxu0 %v161
    %193 = vmatpush.msra.mxu0 %v160
    %194 = vmatpush.msra.mxu0 %v159
    %195 = vmatmul.f32.gmra.mxu0 %v158
    %v196 = vpop.f32.mrf.mxu0
    %v197 = vadd.f32 %v177, %v196
    %198 = vdwg.mxu0
    %v199 = vmax.f32 %v197, 0.0
    %v200 = vld [vmem:[#allocation7] sm:$0xff]
    %v201 = vld [vmem:[#allocation7 + $0x8] sm:$0xff]
    %v202 = vld [vmem:[#allocation7 + $0x10] sm:$0xff]
    %v203 = vld [vmem:[#allocation7 + $0x18] sm:$0xff]
    %v204 = vld [vmem:[#allocation7 + $0x20] sm:$0xff]
    %v205 = vld [vmem:[#allocation7 + $0x28] sm:$0xff]
    %v206 = vld [vmem:[#allocation7 + $0x30] sm:$0xff]
    %v207 = vld [vmem:[#allocation7 + $0x38] sm:$0xff]
    %v208 = vld [vmem:[#allocation7 + $0x40] sm:$0xff]
    %v209 = vld [vmem:[#allocation7 + $0x48] sm:$0xff]
    %v210 = vld [vmem:[#allocation7 + $0x50] sm:$0xff]
    %v211 = vld [vmem:[#allocation7 + $0x58] sm:$0xff]
    %v212 = vld [vmem:[#allocation7 + $0x60] sm:$0xff]
    %v213 = vld [vmem:[#allocation7 + $0x68] sm:$0xff]
    %v214 = vld [vmem:[#allocation7 + $0x70] sm:$0xff]
    %v215 = vld [vmem:[#allocation7 + $0x78] sm:$0xff]
    %v216 = vld [vmem:[#allocation8] sm:$0x1]
    %v218 = vperm.slane %v216, 0
    %220 = vmatpush.msra.mxu0 %v215
    %221 = vmatpush.msra.mxu0 %v214
    %222 = vmatpush.msra.mxu0 %v213
    %223 = vmatpush.msra.mxu0 %v212
    %224 = vmatpush.msra.mxu0 %v211
    %225 = vmatpush.msra.mxu0 %v210
    %226 = vmatpush.msra.mxu0 %v209
    %227 = vmatpush.msra.mxu0 %v208
    %228 = vmatpush.msra.mxu0 %v207
    %229 = vmatpush.msra.mxu0 %v206
    %230 = vmatpush.msra.mxu0 %v205
    %231 = vmatpush.msra.mxu0 %v204
    %232 = vmatpush.msra.mxu0 %v203
    %233 = vmatpush.msra.mxu0 %v202
    %234 = vmatpush.msra.mxu0 %v201
    %235 = vmatpush.msra.mxu0 %v200
    %236 = vmatmul.f32.gmra.mxu0 %v199
    %v237 = vpop.f32.mrf.mxu0
    %v238 = vadd.f32 %v218, %v237
    %239 = vdwg.mxu0
    %v240 = vmax.f32 %v238, 0.0
    %v241 = vld [vmem:[%s7] sm:$0xff]
    %v242 = vld [vmem:[%s7 + $0x8] sm:$0xff]
    %v243 = vld [vmem:[%s7 + $0x10] sm:$0xff]
    %v244 = vld [vmem:[%s7 + $0x18] sm:$0xff]
    %v245 = vld [vmem:[%s7 + $0x20] sm:$0xff]
    %v246 = vld [vmem:[%s7 + $0x28] sm:$0xff]
    %v247 = vld [vmem:[%s7 + $0x30] sm:$0xff]
    %v248 = vld [vmem:[%s7 + $0x38] sm:$0xff]
    %v249 = vld [vmem:[%s7 + $0x40] sm:$0xff]
    %v250 = vld [vmem:[%s7 + $0x48] sm:$0xff]
    %v251 = vld [vmem:[%s7 + $0x50] sm:$0xff]
    %v252 = vld [vmem:[%s7 + $0x58] sm:$0xff]
    %v253 = vld [vmem:[%s7 + $0x60] sm:$0xff]
    %v254 = vld [vmem:[%s7 + $0x68] sm:$0xff]
    %v255 = vld [vmem:[%s7 + $0x70] sm:$0xff]
    %v256 = vld [vmem:[%s7 + $0x78] sm:$0xff]
    %v257 = vld [vmem:[#allocation10] sm:$0x1]
    %v259 = vperm.slane %v257, 0
    %261 = vmatpush.msra.mxu0 %v256
    %262 = vmatpush.msra.mxu0 %v255
    %263 = vmatpush.msra.mxu0 %v254
    %264 = vmatpush.msra.mxu0 %v253
    %265 = vmatpush.msra.mxu0 %v252
    %266 = vmatpush.msra.mxu0 %v251
    %267 = vmatpush.msra.mxu0 %v250
    %268 = vmatpush.msra.mxu0 %v249
    %269 = vmatpush.msra.mxu0 %v248
    %270 = vmatpush.msra.mxu0 %v247
    %271 = vmatpush.msra.mxu0 %v246
    %272 = vmatpush.msra.mxu0 %v245
    %273 = vmatpush.msra.mxu0 %v244
    %274 = vmatpush.msra.mxu0 %v243
    %275 = vmatpush.msra.mxu0 %v242
    %276 = vmatpush.msra.mxu0 %v241
    %277 = vmatmul.f32.gmra.mxu0 %v240
    %v278 = vpop.f32.mrf.mxu0
    %v279 = vadd.f32 %v259, %v278
    %280 = vdwg.mxu0
    %v281 = vld [vmem:[#allocation11] sm:$0x1]
    %v282 = vmax.f32 %v281, -20.0
    %v283 = vmin.f32 %v282, 2.0
    %v284 = vmul.f32 %v283, 1.442695
    %v285 = vpow.pop %v284
    %v286 = vmul.f32 %v283, -2.0
    %v287 = vmul.f32 %v286, 1.442695
    %v288 = vpow.pop %v287
    %v289 = vmul.f32 %v288, 0.5
    %v290 = vsub.f32 0.0, %v283
    %v291 = vsub.f32 %v290, 0.9189385
    %v292 = vld [vmem:[%s10] sm:$0xff]
    %v294 = vperm.slane %v285, 0
    %v296 = vmul.f32 %v294, %v292
    %v297 = vadd.f32 %v279, %v296
    %v298 = vmax.f32 %v297, -1.0
    %v299 = vmin.f32 %v298, 1.0
    %v300 = vsub.f32 %v299, %v279
    %v301 = vmul.f32 %v300, %v300
    %v303 = vperm.slane %v289, 0
    %v305 = vmul.f32 %v301, %v303
    %v307 = vperm.slane %v291, 0
    %v309 = vsub.f32 %v307, %v305
    %vm310 = vcmask 64512
    %v311 = vsel %vm310, %v309, 0.0
    %312 = vadd.xlane.f32.xlu0 %v311
    %v313 = vpop.xlane.xlu0 %312
    %314 = vst.msk [vmem:[#allocation13] sm:$0xff] %vm310, %v299
    %vm315 = vcmask 7168
    %316 = vst.msk [vmem:[%s12] sm:$0xff] %vm315, %v313
    // Predicated region
    $region70: #{_lambda_.1} parent=1 // pred_check
      _
    $region71: #{_lambda_.1} parent=1 // pred_check_branch
      %318 = sbr.rel (0) target = $region73
    $region72: #{_lambda_.1} parent=1 // pred_region
      %320 = vsyncadd [#allocation4], 0
      %s322 = sshll.u32 [#allocation13], 4
      %s323 = int_to_ptr.vmem [resolvable:$true] %s322
      %s324 = sshll.u32 %s11, 4
      %s325 = int_to_ptr.hbm [resolvable:$true] %s324
      %327 = dma.vmem_to_hbm [thread:$0]  %s323, 128, %s325, [#allocation4]
    $region73: #{_lambda_.1} parent=1 // pred_fallthru
      _
    // Predicated region
    $region74: #{_lambda_.1} parent=1 // pred_check
      _
    $region75: #{_lambda_.1} parent=1 // pred_check_branch
      %329 = sbr.rel (0) target = $region77
    $region76: #{_lambda_.1} parent=1 // pred_region
      _
    $region77: #{_lambda_.1} parent=1 // pred_fallthru
      _
    // Predicated region
    $region78: #{_lambda_.1} parent=1 // pred_check
      _
    $region79: #{_lambda_.1} parent=1 // pred_check_branch
      %331 = sbr.rel (0) target = $region81
    $region80: #{_lambda_.1} parent=1 // pred_region
      %333 = dma.done [#allocation4], 128
    $region81: #{_lambda_.1} parent=1 // pred_fallthru
      _
    // Predicated region
    $region82: #{_lambda_.1} parent=1 // pred_check
      _
    $region83: #{_lambda_.1} parent=1 // pred_check_branch
      %335 = sbr.rel (0) target = $region85
    $region84: #{_lambda_.1} parent=1 // pred_region
      _
    $region85: #{_lambda_.1} parent=1 // pred_fallthru
      _
    %336 = vsyncpa [#allocation3], 1
    %337 = vsyncpa [#allocation6], 1
    %338 = vsyncpa [#allocation9], 1
    %339 = vsyncpa [#allocation12], 1
    %340 = vsyncpa [#allocation4], 1

</llo_original>
